<compile_context>
chip_gen: v5e
topology: v5e:2x2
jax: 0.10.0
libtpu: 0.0.40
codegen_flags: <defaults>
</compile_context>

<pallas_src>
import functools

import jax
import jax.numpy as jnp
import numpy as np
from jax import lax
from jax.experimental import pallas as pl
from jax.experimental.pallas import tpu as pltpu


_LANE = 128


def _round_up(x, m):
    return ((x + m - 1) // m) * m


# ----------------------------------------------------------------------------
# Pallas kernel: per-batch attention + fused projections + masked (log-)softmax
# ----------------------------------------------------------------------------
def _attention_kernel(p_ref, q_ref, pmask_ref, qmask_ref, w_ref, b_ref, out_ref):
    f32 = jnp.float32
    bf16 = jnp.bfloat16
    nt = (((1,), (1,)), ((), ()))      # contract last dims of both operands

    Pf = p_ref[0]                      # (Pp, Kp) f32 passage encodings
    Qf = q_ref[0]                      # (Qp, Kp) f32 question encodings
    pmask = pmask_ref[0]               # (1, Pp)
    qmask = qmask_ref[0]               # (1, Qp)
    W = w_ref[...]                     # (6, Kp): rows [wp_s,wp_e, wq_s,wq_e, wpq_s,wpq_e]
    bias = b_ref[...]                  # (2, 1):  [b_start, b_end]

    wp2, wq2, wpq2 = W[0:2], W[2:4], W[4:6]          # fused start/end weights (2, Kp)
    wp_s, wq_s, wpq_s = W[0:1], W[2:3], W[4:5]       # start-head rows (1, Kp)
    b_s = bias[0:1, :]                               # (1, 1)

    Pf_b = Pf.astype(bf16)
    Qf_b = Qf.astype(bf16)

    # Attention scores S[p,q] = wp.Pf[p] + wq.Qf[q] + wpq.(Pf[p]*Qf[q]) + b_s
    cross = lax.dot_general((Pf * wpq_s).astype(bf16), Qf_b, nt,
                            preferred_element_type=f32)            # (Pp, Qp)
    sp = jnp.sum(Pf * wp_s, axis=-1, keepdims=True)                # (Pp, 1) VPU+XLU
    sq = lax.dot_general(wq_s.astype(bf16), Qf_b, nt,
                         preferred_element_type=f32)               # (1, Qp)
    scores = cross + sp + sq + b_s                                 # (Pp, Qp)

    # allennlp.nn.util.masked_softmax (non-memory-efficient variant), with the
    # softmax and renormalization collapsed into one reciprocal (EUP slot).
    sm = scores * qmask
    e = jnp.exp(sm - jnp.max(sm, axis=-1, keepdims=True)) * qmask
    attn = e * pl.reciprocal(jnp.sum(e, axis=-1, keepdims=True) + 1e-13,
                             approx=True)                          # (Pp, Qp)

    # weighted_average = attn @ question_encodings
    WA = jnp.dot(attn.astype(bf16), Qf_b, preferred_element_type=f32)   # (Pp, Kp)

    # Fused start/end projection -> logits laid out (2, Pp), P on lanes.
    logits = (lax.dot_general(wp2.astype(bf16), Pf_b, nt,
                              preferred_element_type=f32)
              + lax.dot_general(wq2.astype(bf16), WA.astype(bf16), nt,
                                preferred_element_type=f32)
              + lax.dot_general(wpq2.astype(bf16), (Pf * WA).astype(bf16), nt,
                                preferred_element_type=f32)
              + bias)                                              # (2, Pp)

    # replace_masked_values(-1e7) + masked log-softmax over the passage axis.
    lg = logits * pmask + (1.0 - pmask) * (-1e7)
    v = lg + jnp.log(jnp.maximum(pmask, 1e-37))
    m = jnp.max(v, axis=-1, keepdims=True)
    ls = v - m - jnp.log(jnp.sum(jnp.exp(v - m), axis=-1, keepdims=True))

    # Pack into one lane-dense (8, Pp) slab: rows 0..3 = s_lg, e_lg, s_ls, e_ls.
    out8 = jnp.concatenate([lg, ls, jnp.zeros((4, lg.shape[-1]), f32)], axis=0)
    out_ref[...] = out8[None]                                      # (1, 8, Pp)


def attention_head_pallas(p_enc, q_enc, pmask, qmask, w_start, b_start,
                          w_end, b_end):
    """p_enc (B,P,2H), q_enc (B,Q,2H), masks (B,P)/(B,Q)."""
    f32 = jnp.float32
    B, P, H2 = p_enc.shape
    Q = q_enc.shape[1]
    Pp = _round_up(P, _LANE)
    Qp = _round_up(Q, _LANE)
    Kp = _round_up(H2, _LANE)

    # Lane-align P / Q / 2H; zero padding is absorbed by the mask math.
    p_pad = jnp.zeros((B, Pp, Kp), f32).at[:, :P, :H2].set(p_enc.astype(f32))
    q_pad = jnp.zeros((B, Qp, Kp), f32).at[:, :Q, :H2].set(q_enc.astype(f32))
    pm = jnp.zeros((B, 1, Pp), f32).at[:, 0, :P].set(pmask.astype(f32))
    qm = jnp.zeros((B, 1, Qp), f32).at[:, 0, :Q].set(qmask.astype(f32))

    ws = w_start.astype(f32)
    we = w_end.astype(f32)

    def pad_row(v):
        return jnp.zeros((1, Kp), f32).at[0, :H2].set(v)

    w6 = jnp.concatenate([
        pad_row(ws[:H2]),        pad_row(we[:H2]),
        pad_row(ws[H2:2 * H2]),  pad_row(we[H2:2 * H2]),
        pad_row(ws[2 * H2:]),    pad_row(we[2 * H2:]),
    ], axis=0)                                                    # (6, Kp)
    bias = jnp.concatenate([b_start.reshape(1, 1), b_end.reshape(1, 1)],
                           axis=0).astype(f32)                    # (2, 1)

    out = pl.pallas_call(
        _attention_kernel,
        out_shape=jax.ShapeDtypeStruct((B, 8, Pp), f32),
        grid=(B,),
        in_specs=[
            pl.BlockSpec((1, Pp, Kp), lambda b: (b, 0, 0)),
            pl.BlockSpec((1, Qp, Kp), lambda b: (b, 0, 0)),
            pl.BlockSpec((1, 1, Pp), lambda b: (b, 0, 0)),
            pl.BlockSpec((1, 1, Qp), lambda b: (b, 0, 0)),
            pl.BlockSpec((6, Kp), lambda b: (0, 0)),
            pl.BlockSpec((2, 1), lambda b: (0, 0)),
        ],
        out_specs=pl.BlockSpec((1, 8, Pp), lambda b: (b, 0, 0)),
        compiler_params=pltpu.CompilerParams(
            dimension_semantics=("parallel",)),   # batch elems independent
    )(p_pad, q_pad, pm, qm, w6, bias)

    start_lg = out[:, 0, :P]
    end_lg = out[:, 1, :P]
    ls_start = out[:, 2, :P]
    ls_end = out[:, 3, :P]
    return start_lg, end_lg, ls_start, ls_end


# ----------------------------------------------------------------------------
# Plain-JAX glue: embedding + bidirectional GRU (packed-sequence semantics)
# ----------------------------------------------------------------------------
def _gru_direction(x, mask, Wih, Whh, bih, bhh, reverse):
    """x (B,T,E), mask (B,T). PyTorch GRU cell; padded steps keep hidden and
    emit zero output (matches pack_padded/pad_packed behavior with trailing pad)."""
    B, T, E = x.shape
    H = Whh.shape[1]

    def cell(h, inp):
        xt, mt = inp                       # (B,E), (B,1)
        gi = xt @ Wih.T + bih              # (B,3H)
        gh = h @ Whh.T + bhh
        i_r, i_z, i_n = jnp.split(gi, 3, axis=-1)
        h_r, h_z, h_n = jnp.split(gh, 3, axis=-1)
        r = jax.nn.sigmoid(i_r + h_r)
        z = jax.nn.sigmoid(i_z + h_z)
        n = jnp.tanh(i_n + r * h_n)
        h_new = (1.0 - z) * n + z * h
        h_out = mt * h_new + (1.0 - mt) * h
        return h_out, h_out * mt

    xs = jnp.swapaxes(x, 0, 1)                     # (T,B,E)
    ms = jnp.swapaxes(mask, 0, 1)[..., None]       # (T,B,1)
    h0 = jnp.zeros((B, H), x.dtype)
    _, ys = lax.scan(cell, h0, (xs, ms), reverse=reverse)
    return jnp.swapaxes(ys, 0, 1)                  # (B,T,H)


def bi_gru(x, mask, params):
    fwd = _gru_direction(x, mask, *params["fwd"], reverse=False)
    bwd = _gru_direction(x, mask, *params["bwd"], reverse=True)
    return jnp.concatenate([fwd, bwd], axis=-1)    # (B,T,2H)


def attention_rnn_forward(passage, question, params):
    pmask = (passage != 0).astype(jnp.float32)
    qmask = (question != 0).astype(jnp.float32)

    emb = params["embedding"]
    embedded_passage = emb[passage]
    embedded_question = emb[question]

    p_enc = bi_gru(embedded_passage, pmask, params["passage_gru"])
    q_enc = bi_gru(embedded_question, qmask, params["question_gru"])

    start_lg, end_lg, ls_start, ls_end = attention_head_pallas(
        p_enc, q_enc, pmask, qmask,
        params["w_start"], params["b_start"],
        params["w_end"], params["b_end"])

    return {
        "start_logits": start_lg,
        "end_logits": end_lg,
        "softmax_start_logits": ls_start,
        "softmax_end_logits": ls_end,
    }


# ----------------------------------------------------------------------------
# Pure-JAX reference of the attention head (for a correctness check)
# ----------------------------------------------------------------------------
def _attention_head_ref(p_enc, q_enc, pmask, qmask, ws, bs, we, be):
    B, P, H2 = p_enc.shape
    Q = q_enc.shape[1]
    ep = jnp.broadcast_to(p_enc[:, :, None, :], (B, P, Q, H2))
    eq = jnp.broadcast_to(q_enc[:, None, :, :], (B, P, Q, H2))
    att_in = jnp.concatenate([ep, eq, ep * eq], axis=-1)
    scores = jnp.einsum("bpqk,k->bpq", att_in, ws) + bs

    qm = jnp.broadcast_to(qmask[:, None, :], (B, P, Q))
    soft = jax.nn.softmax(scores * qm, axis=-1) * qm
    attn = soft / (soft.sum(-1, keepdims=True) + 1e-13)
    WA = jnp.einsum("bpq,bqk->bpk", attn, q_enc)

    comb = jnp.concatenate([p_enc, WA, p_enc * WA], axis=-1)

    def head(w, b):
        lg = jnp.einsum("bpk,k->bp", comb, w) + b
        lg = lg * pmask + (1.0 - pmask) * (-1e7)
        ls = jax.nn.log_softmax(lg + jnp.log(jnp.maximum(pmask, 1e-37)), axis=-1)
        return lg, ls

    s_lg, s_ls = head(ws, bs)
    e_lg, e_ls = head(we, be)
    return s_lg, e_lg, s_ls, e_ls


# ----------------------------------------------------------------------------
# Deterministic parameter init + demo
# ----------------------------------------------------------------------------
def init_params(key, vocab, emb_dim, hidden):
    keys = iter(jax.random.split(key, 32))

    def nrm(shape, scale=0.1):
        return (scale * jax.random.normal(next(keys), shape)).astype(jnp.float32)

    embedding = nrm((vocab, emb_dim), 1.0).at[0].set(0.0)   # padding_idx=0 row

    def gru_dir_params():
        return (nrm((3 * hidden, emb_dim)), nrm((3 * hidden, hidden)),
                nrm((3 * hidden,)), nrm((3 * hidden,)))

    return {
        "embedding": embedding,
        "passage_gru": {"fwd": gru_dir_params(), "bwd": gru_dir_params()},
        "question_gru": {"fwd": gru_dir_params(), "bwd": gru_dir_params()},
        "w_start": nrm((6 * hidden,)),
        "b_start": nrm((1,)),
        "w_end": nrm((6 * hidden,)),
        "b_end": nrm((1,)),
    }


if __name__ == "__main__":
    B, P, Q = 2, 16, 8
    VOCAB, EMB_DIM, HIDDEN = 50, 24, 32

    key = jax.random.PRNGKey(0)
    k_par, k_p, k_q = jax.random.split(key, 3)
    params = init_params(k_par, VOCAB, EMB_DIM, HIDDEN)

    passage = jax.random.randint(k_p, (B, P), 1, VOCAB, dtype=jnp.int32)
    question = jax.random.randint(k_q, (B, Q), 1, VOCAB, dtype=jnp.int32)
    # trailing padding on batch element 1 (batch element 0 stays full length)
    passage = passage.at[1, 12:].set(0)
    question = question.at[1, 6:].set(0)

    out = jax.jit(functools.partial(attention_rnn_forward, params=params))(
        passage, question)
    jax.block_until_ready(out)

    # Correctness check of the Pallas attention head against pure JAX (f32).
    # Kernel runs the MXU in bf16 + approx reciprocal, so the tolerance is
    # loosened to 3e-2 (masked positions are exact at -1e7 on both sides).
    pmask = (passage != 0).astype(jnp.float32)
    qmask = (question != 0).astype(jnp.float32)
    p_enc = bi_gru(params["embedding"][passage], pmask, params["passage_gru"])
    q_enc = bi_gru(params["embedding"][question], qmask, params["question_gru"])
    ref = _attention_head_ref(p_enc, q_enc, pmask, qmask,
                              params["w_start"], params["b_start"][0],
                              params["w_end"], params["b_end"][0])
    got = (out["start_logits"], out["end_logits"],
           out["softmax_start_logits"], out["softmax_end_logits"])
    for g, r in zip(got, ref):
        np.testing.assert_allclose(np.asarray(g), np.asarray(r),
                                   rtol=3e-2, atol=3e-2)

    print("KERNEL_OK")
</pallas_src>

<mosaic_0001>
module attributes {stable_mosaic.version = 11 : i64} {
  func.func @_attention_kernel(%arg0: i32, %arg1: memref<1x128x128xf32, #tpu.memory_space<vmem>>, %arg2: memref<1x128x128xf32, #tpu.memory_space<vmem>>, %arg3: memref<1x1x128xf32, #tpu.memory_space<vmem>>, %arg4: memref<1x1x128xf32, #tpu.memory_space<vmem>>, %arg5: memref<6x128xf32, #tpu.memory_space<vmem>>, %arg6: memref<2x1xf32, #tpu.memory_space<vmem>>, %arg7: memref<1x8x128xf32, #tpu.memory_space<vmem>>) attributes {dimension_semantics = [#tpu.dimension_semantics<parallel>], iteration_bounds = array<i64: 2>, scalar_prefetch = 0 : i64, scratch_operands = 0 : i64, tpu.core_type = #tpu.core_type<tc>, window_params = [{transform_indices = @transform_0, window_bounds = array<i64: 1, 128, 128>}, {transform_indices = @transform_1, window_bounds = array<i64: 1, 128, 128>}, {transform_indices = @transform_2, window_bounds = array<i64: 1, 1, 128>}, {transform_indices = @transform_3, window_bounds = array<i64: 1, 1, 128>}, {pipeline_mode = #tpu.pipeline_mode<synchronous>, transform_indices = @transform_4, window_bounds = array<i64: 6, 128>}, {pipeline_mode = #tpu.pipeline_mode<synchronous>, transform_indices = @transform_5, window_bounds = array<i64: 2, 1>}, {transform_indices = @transform_6, window_bounds = array<i64: 1, 8, 128>}]} {
    %c0 = arith.constant 0 : index
    %c0_0 = arith.constant 0 : index
    %c0_1 = arith.constant 0 : index
    %0 = vector.load %arg1[%c0, %c0_0, %c0_1] : memref<1x128x128xf32, #tpu.memory_space<vmem>>, vector<1x128x128xf32>
    %1 = vector.shape_cast %0 : vector<1x128x128xf32> to vector<128x128xf32>
    %c0_2 = arith.constant 0 : index
    %c0_3 = arith.constant 0 : index
    %c0_4 = arith.constant 0 : index
    %2 = vector.load %arg2[%c0_2, %c0_3, %c0_4] : memref<1x128x128xf32, #tpu.memory_space<vmem>>, vector<1x128x128xf32>
    %3 = vector.shape_cast %2 : vector<1x128x128xf32> to vector<128x128xf32>
    %c0_5 = arith.constant 0 : index
    %c0_6 = arith.constant 0 : index
    %c0_7 = arith.constant 0 : index
    %4 = vector.load %arg3[%c0_5, %c0_6, %c0_7] : memref<1x1x128xf32, #tpu.memory_space<vmem>>, vector<1x1x128xf32>
    %5 = vector.shape_cast %4 : vector<1x1x128xf32> to vector<1x128xf32>
    %c0_8 = arith.constant 0 : index
    %c0_9 = arith.constant 0 : index
    %c0_10 = arith.constant 0 : index
    %6 = vector.load %arg4[%c0_8, %c0_9, %c0_10] : memref<1x1x128xf32, #tpu.memory_space<vmem>>, vector<1x1x128xf32>
    %7 = vector.shape_cast %6 : vector<1x1x128xf32> to vector<1x128xf32>
    %c0_11 = arith.constant 0 : index
    %c0_12 = arith.constant 0 : index
    %8 = vector.load %arg5[%c0_11, %c0_12] : memref<6x128xf32, #tpu.memory_space<vmem>>, vector<6x128xf32>
    %c0_13 = arith.constant 0 : index
    %c0_14 = arith.constant 0 : index
    %9 = vector.load %arg6[%c0_13, %c0_14] : memref<2x1xf32, #tpu.memory_space<vmem>>, vector<2x1xf32>
    %10 = vector.extract_strided_slice %8 {offsets = [0, 0], sizes = [2, 128], strides = [1, 1]} : vector<6x128xf32> to vector<2x128xf32>
    %11 = vector.extract_strided_slice %8 {offsets = [2, 0], sizes = [2, 128], strides = [1, 1]} : vector<6x128xf32> to vector<2x128xf32>
    %12 = vector.extract_strided_slice %8 {offsets = [4, 0], sizes = [2, 128], strides = [1, 1]} : vector<6x128xf32> to vector<2x128xf32>
    %13 = vector.extract_strided_slice %8 {offsets = [0, 0], sizes = [1, 128], strides = [1, 1]} : vector<6x128xf32> to vector<1x128xf32>
    %14 = vector.extract_strided_slice %8 {offsets = [2, 0], sizes = [1, 128], strides = [1, 1]} : vector<6x128xf32> to vector<1x128xf32>
    %15 = vector.extract_strided_slice %8 {offsets = [4, 0], sizes = [1, 128], strides = [1, 1]} : vector<6x128xf32> to vector<1x128xf32>
    %16 = vector.extract_strided_slice %9 {offsets = [0, 0], sizes = [1, 1], strides = [1, 1]} : vector<2x1xf32> to vector<1x1xf32>
    %17 = arith.truncf %1 : vector<128x128xf32> to vector<128x128xbf16>
    %18 = arith.truncf %3 : vector<128x128xf32> to vector<128x128xbf16>
    %19 = vector.broadcast %15 : vector<1x128xf32> to vector<128x128xf32>
    %20 = arith.mulf %1, %19 : vector<128x128xf32>
    %21 = arith.truncf %20 : vector<128x128xf32> to vector<128x128xbf16>
    %cst = arith.constant dense<0.000000e+00> : vector<128x128xf32>
    %22 = tpu.matmul %21, %18, %cst {dimension_numbers = #tpu.dot_dimension_numbers<[1], [1], [0], [0], [0, 0, 1, 0], [], []>} : vector<128x128xbf16>, vector<128x128xbf16>, vector<128x128xf32> -> vector<128x128xf32>
    %23 = vector.broadcast %13 : vector<1x128xf32> to vector<128x128xf32>
    %24 = arith.mulf %1, %23 : vector<128x128xf32>
    %cst_15 = arith.constant dense<0.000000e+00> : vector<128xf32>
    %25 = vector.multi_reduction <add>, %24, %cst_15 [1] : vector<128x128xf32> to vector<128xf32>
    %26 = vector.shape_cast %25 : vector<128xf32> to vector<128x1xf32>
    %27 = arith.truncf %14 : vector<1x128xf32> to vector<1x128xbf16>
    %cst_16 = arith.constant dense<0.000000e+00> : vector<1x128xf32>
    %28 = tpu.matmul %27, %18, %cst_16 {dimension_numbers = #tpu.dot_dimension_numbers<[1], [1], [0], [0], [0, 0, 1, 0], [], []>} : vector<1x128xbf16>, vector<128x128xbf16>, vector<1x128xf32> -> vector<1x128xf32>
    %29 = vector.broadcast %26 : vector<128x1xf32> to vector<128x128xf32>
    %30 = arith.addf %22, %29 : vector<128x128xf32>
    %31 = vector.broadcast %28 : vector<1x128xf32> to vector<128x128xf32>
    %32 = arith.addf %30, %31 : vector<128x128xf32>
    %33 = vector.broadcast %16 : vector<1x1xf32> to vector<128x128xf32>
    %34 = arith.addf %32, %33 : vector<128x128xf32>
    %35 = vector.broadcast %7 : vector<1x128xf32> to vector<128x128xf32>
    %36 = arith.mulf %34, %35 : vector<128x128xf32>
    %cst_17 = arith.constant dense<0xFF800000> : vector<128xf32>
    %37 = vector.multi_reduction <maximumf>, %36, %cst_17 [1] : vector<128x128xf32> to vector<128xf32>
    %38 = vector.shape_cast %37 : vector<128xf32> to vector<128x1xf32>
    %39 = vector.broadcast %38 : vector<128x1xf32> to vector<128x128xf32>
    %40 = arith.subf %36, %39 : vector<128x128xf32>
    %41 = math.exp %40 : vector<128x128xf32>
    %42 = vector.broadcast %7 : vector<1x128xf32> to vector<128x128xf32>
    %43 = arith.mulf %41, %42 : vector<128x128xf32>
    %cst_18 = arith.constant dense<0.000000e+00> : vector<128xf32>
    %44 = vector.multi_reduction <add>, %43, %cst_18 [1] : vector<128x128xf32> to vector<128xf32>
    %45 = vector.shape_cast %44 : vector<128xf32> to vector<128x1xf32>
    %cst_19 = arith.constant 9.99999982E-14 : f32
    %46 = vector.broadcast %cst_19 : f32 to vector<128x1xf32>
    %47 = arith.addf %45, %46 : vector<128x1xf32>
    %48 = tpu.reciprocal %47 {approx = true} : vector<128x1xf32> -> vector<128x1xf32>
    %49 = vector.broadcast %48 : vector<128x1xf32> to vector<128x128xf32>
    %50 = arith.mulf %43, %49 : vector<128x128xf32>
    %51 = arith.truncf %50 : vector<128x128xf32> to vector<128x128xbf16>
    %cst_20 = arith.constant dense<0.000000e+00> : vector<128x128xf32>
    %52 = tpu.matmul %51, %18, %cst_20 {dimension_numbers = #tpu.dot_dimension_numbers<[1], [0], [0], [1], [0, 0, 1, 1], [], []>} : vector<128x128xbf16>, vector<128x128xbf16>, vector<128x128xf32> -> vector<128x128xf32>
    %53 = arith.truncf %10 : vector<2x128xf32> to vector<2x128xbf16>
    %cst_21 = arith.constant dense<0.000000e+00> : vector<2x128xf32>
    %54 = tpu.matmul %53, %17, %cst_21 {dimension_numbers = #tpu.dot_dimension_numbers<[1], [1], [0], [0], [0, 0, 1, 0], [], []>} : vector<2x128xbf16>, vector<128x128xbf16>, vector<2x128xf32> -> vector<2x128xf32>
    %55 = arith.truncf %11 : vector<2x128xf32> to vector<2x128xbf16>
    %56 = arith.truncf %52 : vector<128x128xf32> to vector<128x128xbf16>
    %cst_22 = arith.constant dense<0.000000e+00> : vector<2x128xf32>
    %57 = tpu.matmul %55, %56, %cst_22 {dimension_numbers = #tpu.dot_dimension_numbers<[1], [1], [0], [0], [0, 0, 1, 0], [], []>} : vector<2x128xbf16>, vector<128x128xbf16>, vector<2x128xf32> -> vector<2x128xf32>
    %58 = arith.addf %54, %57 : vector<2x128xf32>
    %59 = arith.truncf %12 : vector<2x128xf32> to vector<2x128xbf16>
    %60 = arith.mulf %1, %52 : vector<128x128xf32>
    %61 = arith.truncf %60 : vector<128x128xf32> to vector<128x128xbf16>
    %cst_23 = arith.constant dense<0.000000e+00> : vector<2x128xf32>
    %62 = tpu.matmul %59, %61, %cst_23 {dimension_numbers = #tpu.dot_dimension_numbers<[1], [1], [0], [0], [0, 0, 1, 0], [], []>} : vector<2x128xbf16>, vector<128x128xbf16>, vector<2x128xf32> -> vector<2x128xf32>
    %63 = arith.addf %58, %62 : vector<2x128xf32>
    %64 = vector.broadcast %9 : vector<2x1xf32> to vector<2x128xf32>
    %65 = arith.addf %63, %64 : vector<2x128xf32>
    %66 = vector.broadcast %5 : vector<1x128xf32> to vector<2x128xf32>
    %67 = arith.mulf %65, %66 : vector<2x128xf32>
    %cst_24 = arith.constant 1.000000e+00 : f32
    %68 = vector.broadcast %cst_24 : f32 to vector<1x128xf32>
    %69 = arith.subf %68, %5 : vector<1x128xf32>
    %cst_25 = arith.constant -1.000000e+07 : f32
    %70 = vector.broadcast %cst_25 : f32 to vector<1x128xf32>
    %71 = arith.mulf %69, %70 : vector<1x128xf32>
    %72 = vector.broadcast %71 : vector<1x128xf32> to vector<2x128xf32>
    %73 = arith.addf %67, %72 : vector<2x128xf32>
    %cst_26 = arith.constant 9.99999991E-38 : f32
    %74 = vector.broadcast %cst_26 : f32 to vector<1x128xf32>
    %75 = arith.maximumf %5, %74 : vector<1x128xf32>
    %76 = math.log %75 : vector<1x128xf32>
    %77 = vector.broadcast %76 : vector<1x128xf32> to vector<2x128xf32>
    %78 = arith.addf %73, %77 : vector<2x128xf32>
    %cst_27 = arith.constant dense<0xFF800000> : vector<2xf32>
    %79 = vector.multi_reduction <maximumf>, %78, %cst_27 [1] : vector<2x128xf32> to vector<2xf32>
    %80 = vector.shape_cast %79 : vector<2xf32> to vector<2x1xf32>
    %81 = vector.broadcast %80 : vector<2x1xf32> to vector<2x128xf32>
    %82 = arith.subf %78, %81 : vector<2x128xf32>
    %83 = vector.broadcast %80 : vector<2x1xf32> to vector<2x128xf32>
    %84 = arith.subf %78, %83 : vector<2x128xf32>
    %85 = math.exp %84 : vector<2x128xf32>
    %cst_28 = arith.constant dense<0.000000e+00> : vector<2xf32>
    %86 = vector.multi_reduction <add>, %85, %cst_28 [1] : vector<2x128xf32> to vector<2xf32>
    %87 = vector.shape_cast %86 : vector<2xf32> to vector<2x1xf32>
    %88 = math.log %87 : vector<2x1xf32>
    %89 = vector.broadcast %88 : vector<2x1xf32> to vector<2x128xf32>
    %90 = arith.subf %82, %89 : vector<2x128xf32>
    %cst_29 = arith.constant 0.000000e+00 : f32
    %91 = vector.broadcast %cst_29 : f32 to vector<4x128xf32>
    %92 = tpu.concatenate %73, %90, %91 in 0 : vector<2x128xf32>, vector<2x128xf32>, vector<4x128xf32> -> vector<8x128xf32>
    %93 = vector.shape_cast %92 : vector<8x128xf32> to vector<1x8x128xf32>
    %c0_30 = arith.constant 0 : index
    %c0_31 = arith.constant 0 : index
    %c0_32 = arith.constant 0 : index
    %94 = vector.load %arg7[%c0_30, %c0_31, %c0_32] : memref<1x8x128xf32, #tpu.memory_space<vmem>>, vector<1x8x128xf32>
    tpu.vector_store %arg7[%c0_30, %c0_31, %c0_32], %93 {strides = array<i32>} : memref<1x8x128xf32, #tpu.memory_space<vmem>>, vector<1x8x128xf32>,
    return
  }
  func.func @transform_0(%arg0: i32) -> (i32, i32, i32) {
    %c0_i32 = arith.constant 0 : i32
    %c0_i32_0 = arith.constant 0 : i32
    %c0_i32_1 = arith.constant 0 : i32
    return %arg0, %c0_i32, %c0_i32_0 : i32, i32, i32
  }
  func.func @transform_1(%arg0: i32) -> (i32, i32, i32) {
    %c0_i32 = arith.constant 0 : i32
    %c0_i32_0 = arith.constant 0 : i32
    %c0_i32_1 = arith.constant 0 : i32
    return %arg0, %c0_i32, %c0_i32_0 : i32, i32, i32
  }
  func.func @transform_2(%arg0: i32) -> (i32, i32, i32) {
    %c0_i32 = arith.constant 0 : i32
    %c0_i32_0 = arith.constant 0 : i32
    %c0_i32_1 = arith.constant 0 : i32
    return %arg0, %c0_i32, %c0_i32_0 : i32, i32, i32
  }
  func.func @transform_3(%arg0: i32) -> (i32, i32, i32) {
    %c0_i32 = arith.constant 0 : i32
    %c0_i32_0 = arith.constant 0 : i32
    %c0_i32_1 = arith.constant 0 : i32
    return %arg0, %c0_i32, %c0_i32_0 : i32, i32, i32
  }
  func.func @transform_4(%arg0: i32) -> (i32, i32) {
    %c0_i32 = arith.constant 0 : i32
    %c0_i32_0 = arith.constant 0 : i32
    %c0_i32_1 = arith.constant 0 : i32
    return %c0_i32, %c0_i32_0 : i32, i32
  }
  func.func @transform_5(%arg0: i32) -> (i32, i32) {
    %c0_i32 = arith.constant 0 : i32
    %c0_i32_0 = arith.constant 0 : i32
    %c0_i32_1 = arith.constant 0 : i32
    return %c0_i32, %c0_i32_0 : i32, i32
  }
  func.func @transform_6(%arg0: i32) -> (i32, i32, i32) {
    %c0_i32 = arith.constant 0 : i32
    %c0_i32_0 = arith.constant 0 : i32
    %c0_i32_1 = arith.constant 0 : i32
    return %arg0, %c0_i32, %c0_i32_0 : i32, i32, i32
  }
}

</mosaic_0001>

<llo_original>
// kernel: attention_rnn_forward.1
$region0: #{attention_rnn_forward.1}
  #allocation0 [shape = 'u32[]', space=smem, size = 0x4, offset = 0x4, fixed_abs, tag = 'smem constant byte address 0x4 - core index']
  #allocation1 [shape = 'u32[72,128]{1,0:T(1,128)}', space=vmem, size = 0x9000, scoped, tag = 'internal scratch']
  %s0 = inlined_call_operand.vmem [shape: f32[2,128,128], index: 0, kind: input, shape index: {}]
  %s1 = inlined_call_operand.vmem [shape: f32[2,128,128], index: 1, kind: input, shape index: {}]
  %s2 = inlined_call_operand.vmem [shape: f32[2,1,128], index: 2, kind: input, shape index: {}]
  %s3 = inlined_call_operand.vmem [shape: f32[2,1,128], index: 3, kind: input, shape index: {}]
  %s4 = inlined_call_operand.vmem [shape: f32[6,128], index: 4, kind: input, shape index: {}]
  %s5 = inlined_call_operand.vmem [shape: f32[2,1], index: 5, kind: input, shape index: {}]
  %s6 = inlined_call_operand.vmem [shape: f32[2,8,128], index: 6, kind: output, shape index: {}]
  %s7 = sld [smem:[#allocation0]]
  $region57: #{attention_rnn_forward.1} parent=0
    _
  %s9 = ssub.s32 1, %s7
  %s10 = scalar_select 0, %s9, %s7
  loop: start=0, step=1, limit=4
  $region2: #{attention_rnn_forward.1} parent=0 // loop_pre_header
    _
  $region3: #{attention_rnn_forward.1} parent=0 // loop_header
    %s12 = sphi 0, %s16
    %p13 = scmp.ge.s32.totalorder %s12, 4
    %s22 = sphi 0, %s24
    %s25 = sphi 0, %s22
    %s26 = sphi 0, %s25
    %s42 = sphi 0, %s26
    %s48 = sphi 0, %s50
    %s51 = sphi 0, %s48
    %s52 = sphi 0, %s51
    %s68 = sphi 0, %s52
    %s74 = sphi 0, %s76
    %s77 = sphi 0, %s74
    %s78 = sphi 0, %s77
    %s94 = sphi 0, %s78
    %s100 = sphi 0, %s102
    %s103 = sphi 0, %s100
    %s104 = sphi 0, %s103
    %s120 = sphi 0, %s104
    %s124 = sphi 0, %s124
    %s126 = sphi 0, %s124
    %s127 = sphi 0, %s126
    %s141 = sphi 0, %s127
    %s145 = sphi 0, %s145
    %s147 = sphi 0, %s145
    %s148 = sphi 0, %s147
    %s162 = sphi 0, %s148
    %s168 = sphi 0, %s170
    %s171 = sphi 0, %s168
    %s172 = sphi 0, %s171
    %s188 = sphi 0, %s172
  $region4: #{attention_rnn_forward.1} parent=0 // loop_header_branch
    %15 = sbr.rel (%p13) target = $region8
  $region5: #{attention_rnn_forward.1} parent=0 // loop_body
    %s17 = ssub.s32 %s12, 1
    %s18 = ssub.s32 %s12, 2
    %s19 = sadd.s32 %s12, 1
    %s20 = ssub.s32 %s12, %s19
    %p21 = scmp.eq.s32.totalorder %s20, 0
    %s23 = sadd.s32 %s22, 1
    %s24 = scalar_select %p21, %s22, %s23
    %p27 = pneg %p21
    %p28 = scmp.eq.s32.totalorder %s12, 1
    %p29 = por %p27, %p28
    %p30 = scmp.ne.s32.totalorder %s22, %s25
    %p31 = scmp.eq.s32.totalorder %s12, 0
    %p32 = por %p30, %p31
    %p33 = scmp.ne.s32.totalorder %s22, %s25
    %p34 = scmp.eq.s32.totalorder %s17, 1
    %p35 = por %p33, %p34
    %p36 = scmp.ne.s32.totalorder %s25, %s26
    %p37 = scmp.eq.s32.totalorder %s17, 0
    %p38 = por %p36, %p37
    %p39 = scmp.ne.s32.totalorder %s25, %s26
    %p40 = scmp.eq.s32.totalorder %s18, 1
    %p41 = por %p39, %p40
    %p43 = scmp.ne.s32.totalorder %s26, %s42
    %p44 = scmp.eq.s32.totalorder %s18, 0
    %p45 = por %p43, %p44
    %s46 = ssub.s32 %s12, %s19
    %p47 = scmp.eq.s32.totalorder %s46, 0
    %s49 = sadd.s32 %s48, 1
    %s50 = scalar_select %p47, %s48, %s49
    %p53 = pneg %p47
    %p54 = scmp.eq.s32.totalorder %s12, 1
    %p55 = por %p53, %p54
    %p56 = scmp.ne.s32.totalorder %s48, %s51
    %p57 = scmp.eq.s32.totalorder %s12, 0
    %p58 = por %p56, %p57
    %p59 = scmp.ne.s32.totalorder %s48, %s51
    %p60 = scmp.eq.s32.totalorder %s17, 1
    %p61 = por %p59, %p60
    %p62 = scmp.ne.s32.totalorder %s51, %s52
    %p63 = scmp.eq.s32.totalorder %s17, 0
    %p64 = por %p62, %p63
    %p65 = scmp.ne.s32.totalorder %s51, %s52
    %p66 = scmp.eq.s32.totalorder %s18, 1
    %p67 = por %p65, %p66
    %p69 = scmp.ne.s32.totalorder %s52, %s68
    %p70 = scmp.eq.s32.totalorder %s18, 0
    %p71 = por %p69, %p70
    %s72 = ssub.s32 %s12, %s19
    %p73 = scmp.eq.s32.totalorder %s72, 0
    %s75 = sadd.s32 %s74, 1
    %s76 = scalar_select %p73, %s74, %s75
    %p79 = pneg %p73
    %p80 = scmp.eq.s32.totalorder %s12, 1
    %p81 = por %p79, %p80
    %p82 = scmp.ne.s32.totalorder %s74, %s77
    %p83 = scmp.eq.s32.totalorder %s12, 0
    %p84 = por %p82, %p83
    %p85 = scmp.ne.s32.totalorder %s74, %s77
    %p86 = scmp.eq.s32.totalorder %s17, 1
    %p87 = por %p85, %p86
    %p88 = scmp.ne.s32.totalorder %s77, %s78
    %p89 = scmp.eq.s32.totalorder %s17, 0
    %p90 = por %p88, %p89
    %p91 = scmp.ne.s32.totalorder %s77, %s78
    %p92 = scmp.eq.s32.totalorder %s18, 1
    %p93 = por %p91, %p92
    %p95 = scmp.ne.s32.totalorder %s78, %s94
    %p96 = scmp.eq.s32.totalorder %s18, 0
    %p97 = por %p95, %p96
    %s98 = ssub.s32 %s12, %s19
    %p99 = scmp.eq.s32.totalorder %s98, 0
    %s101 = sadd.s32 %s100, 1
    %s102 = scalar_select %p99, %s100, %s101
    %p105 = pneg %p99
    %p106 = scmp.eq.s32.totalorder %s12, 1
    %p107 = por %p105, %p106
    %p108 = scmp.ne.s32.totalorder %s100, %s103
    %p109 = scmp.eq.s32.totalorder %s12, 0
    %p110 = por %p108, %p109
    %p111 = scmp.ne.s32.totalorder %s100, %s103
    %p112 = scmp.eq.s32.totalorder %s17, 1
    %p113 = por %p111, %p112
    %p114 = scmp.ne.s32.totalorder %s103, %s104
    %p115 = scmp.eq.s32.totalorder %s17, 0
    %p116 = por %p114, %p115
    %p117 = scmp.ne.s32.totalorder %s103, %s104
    %p118 = scmp.eq.s32.totalorder %s18, 1
    %p119 = por %p117, %p118
    %p121 = scmp.ne.s32.totalorder %s104, %s120
    %p122 = scmp.eq.s32.totalorder %s18, 0
    %p123 = por %p121, %p122
    %s125 = sadd.s32 %s124, 1
    %p128 = scmp.eq.s32.totalorder %s12, 1
    %p129 = scmp.ne.s32.totalorder %s124, %s126
    %p130 = scmp.eq.s32.totalorder %s12, 0
    %p131 = por %p129, %p130
    %p132 = scmp.ne.s32.totalorder %s124, %s126
    %p133 = scmp.eq.s32.totalorder %s17, 1
    %p134 = por %p132, %p133
    %p135 = scmp.ne.s32.totalorder %s126, %s127
    %p136 = scmp.eq.s32.totalorder %s17, 0
    %p137 = por %p135, %p136
    %p138 = scmp.ne.s32.totalorder %s126, %s127
    %p139 = scmp.eq.s32.totalorder %s18, 1
    %p140 = por %p138, %p139
    %p142 = scmp.ne.s32.totalorder %s127, %s141
    %p143 = scmp.eq.s32.totalorder %s18, 0
    %p144 = por %p142, %p143
    %s146 = sadd.s32 %s145, 1
    %p149 = scmp.eq.s32.totalorder %s12, 1
    %p150 = scmp.ne.s32.totalorder %s145, %s147
    %p151 = scmp.eq.s32.totalorder %s12, 0
    %p152 = por %p150, %p151
    %p153 = scmp.ne.s32.totalorder %s145, %s147
    %p154 = scmp.eq.s32.totalorder %s17, 1
    %p155 = por %p153, %p154
    %p156 = scmp.ne.s32.totalorder %s147, %s148
    %p157 = scmp.eq.s32.totalorder %s17, 0
    %p158 = por %p156, %p157
    %p159 = scmp.ne.s32.totalorder %s147, %s148
    %p160 = scmp.eq.s32.totalorder %s18, 1
    %p161 = por %p159, %p160
    %p163 = scmp.ne.s32.totalorder %s148, %s162
    %p164 = scmp.eq.s32.totalorder %s18, 0
    %p165 = por %p163, %p164
    %s166 = ssub.s32 %s12, %s19
    %p167 = scmp.eq.s32.totalorder %s166, 0
    %s169 = sadd.s32 %s168, 1
    %s170 = scalar_select %p167, %s168, %s169
    %p173 = pneg %p167
    %p174 = scmp.eq.s32.totalorder %s12, 1
    %p175 = por %p173, %p174
    %p176 = scmp.ne.s32.totalorder %s168, %s171
    %p177 = scmp.eq.s32.totalorder %s12, 0
    %p178 = por %p176, %p177
    %p179 = scmp.ne.s32.totalorder %s168, %s171
    %p180 = scmp.eq.s32.totalorder %s17, 1
    %p181 = por %p179, %p180
    %p182 = scmp.ne.s32.totalorder %s171, %s172
    %p183 = scmp.eq.s32.totalorder %s17, 0
    %p184 = por %p182, %p183
    %p185 = scmp.ne.s32.totalorder %s171, %s172
    %p186 = scmp.eq.s32.totalorder %s18, 1
    %p187 = por %p185, %p186
    %p189 = scmp.ne.s32.totalorder %s172, %s188
    %p190 = scmp.eq.s32.totalorder %s18, 0
    %p191 = por %p189, %p190
    %p192 = scmp.le.s32.totalorder 1, %s12
    %p193 = scmp.lt.s32.totalorder %s12, 3
    %p194 = pnand %p192, %p193
    %p195 = pneg %p194
    // Predicated region
    $region9: #{attention_rnn_forward.1} parent=5 // pred_check
      _
    $region10: #{attention_rnn_forward.1} parent=5 // pred_check_branch
      %197 = sbr.rel (%p194) target = $region12
    $region11: #{attention_rnn_forward.1} parent=5 // pred_region
      %s198 = ssub.s32 %s12, 1
      // Predicated region
      $region13: #{attention_rnn_forward.1} parent=11 // pred_check
        %p199 = pneg %p137
      $region14: #{attention_rnn_forward.1} parent=11 // pred_check_branch
        %201 = sbr.rel (%p199) target = $region16
      $region15: #{attention_rnn_forward.1} parent=11 // pred_region
        _
      $region16: #{attention_rnn_forward.1} parent=11 // pred_fallthru
        _
      // Predicated region
      $region17: #{attention_rnn_forward.1} parent=11 // pred_check
        %p202 = pneg %p158
      $region18: #{attention_rnn_forward.1} parent=11 // pred_check_branch
        %204 = sbr.rel (%p202) target = $region20
      $region19: #{attention_rnn_forward.1} parent=11 // pred_region
        _
      $region20: #{attention_rnn_forward.1} parent=11 // pred_fallthru
        _
    $region12: #{attention_rnn_forward.1} parent=5 // pred_fallthru
      _
    %p205 = scmp.lt.s32.totalorder %s12, 2
    // Predicated region
    $region21: #{attention_rnn_forward.1} parent=5 // pred_check
      %p206 = pneg %p205
    $region22: #{attention_rnn_forward.1} parent=5 // pred_check_branch
      %208 = sbr.rel (%p206) target = $region24
    $region23: #{attention_rnn_forward.1} parent=5 // pred_region
      // Predicated region
      $region25: #{attention_rnn_forward.1} parent=23 // pred_check
        %p209 = pneg %p32
      $region26: #{attention_rnn_forward.1} parent=23 // pred_check_branch
        %211 = sbr.rel (%p209) target = $region28
      $region27: #{attention_rnn_forward.1} parent=23 // pred_region
        %p212 = scmp.lt.s32.totalorder %s12, 1
        %s213 = scalar_select %p212, %s12, 1
        %s214 = smul.addr %s213, 16
        %s215 = smul.addr %s214, 8
        %s216 = scalar_lea.vmem %s0, %s215
      $region28: #{attention_rnn_forward.1} parent=23 // pred_fallthru
        _
      // Predicated region
      $region29: #{attention_rnn_forward.1} parent=23 // pred_check
        %p217 = pneg %p58
      $region30: #{attention_rnn_forward.1} parent=23 // pred_check_branch
        %219 = sbr.rel (%p217) target = $region32
      $region31: #{attention_rnn_forward.1} parent=23 // pred_region
        %p220 = scmp.lt.s32.totalorder %s12, 1
        %s221 = scalar_select %p220, %s12, 1
        %s222 = smul.addr %s221, 16
        %s223 = smul.addr %s222, 8
        %s224 = scalar_lea.vmem %s1, %s223
      $region32: #{attention_rnn_forward.1} parent=23 // pred_fallthru
        _
      // Predicated region
      $region33: #{attention_rnn_forward.1} parent=23 // pred_check
        %p225 = pneg %p84
      $region34: #{attention_rnn_forward.1} parent=23 // pred_check_branch
        %227 = sbr.rel (%p225) target = $region36
      $region35: #{attention_rnn_forward.1} parent=23 // pred_region
        %p228 = scmp.lt.s32.totalorder %s12, 1
        %s229 = scalar_select %p228, %s12, 1
        %s230 = scalar_lea.vmem %s2, %s229
      $region36: #{attention_rnn_forward.1} parent=23 // pred_fallthru
        _
      // Predicated region
      $region37: #{attention_rnn_forward.1} parent=23 // pred_check
        %p231 = pneg %p110
      $region38: #{attention_rnn_forward.1} parent=23 // pred_check_branch
        %233 = sbr.rel (%p231) target = $region40
      $region39: #{attention_rnn_forward.1} parent=23 // pred_region
        %p234 = scmp.lt.s32.totalorder %s12, 1
        %s235 = scalar_select %p234, %s12, 1
        %s236 = scalar_lea.vmem %s3, %s235
      $region40: #{attention_rnn_forward.1} parent=23 // pred_fallthru
        _
    $region24: #{attention_rnn_forward.1} parent=5 // pred_fallthru
      _
    %p237 = scmp.le.s32.totalorder 1, %s12
    %p238 = scmp.lt.s32.totalorder %s12, 3
    %p239 = pnand %p237, %p238
    %p240 = pneg %p239
    // Predicated region
    $region41: #{attention_rnn_forward.1} parent=5 // pred_check
      _
    $region42: #{attention_rnn_forward.1} parent=5 // pred_check_branch
      %242 = sbr.rel (%p239) target = $region44
    $region43: #{attention_rnn_forward.1} parent=5 // pred_region
      %s243 = ssub.s32 %s12, 1
      %p244 = scmp.lt.s32.totalorder %s17, 1
      %s245 = scalar_select %p244, %s17, 1
      %s246 = smul.addr %s245, 16
      %s247 = smul.addr %s246, 8
      %s248 = scalar_lea.vmem %s0, %s247
      %p249 = pneg %p38
      %p250 = pneg %p35
      %p251 = scmp.lt.s32.totalorder %s17, 1
      %s252 = scalar_select %p251, %s17, 1
      %s253 = smul.addr %s252, 16
      %s254 = smul.addr %s253, 8
      %s255 = scalar_lea.vmem %s1, %s254
      %p256 = pneg %p64
      %p257 = pneg %p61
      %p258 = scmp.lt.s32.totalorder %s17, 1
      %s259 = scalar_select %p258, %s17, 1
      %s260 = scalar_lea.vmem %s2, %s259
      %p261 = pneg %p90
      %p262 = pneg %p87
      %p263 = scmp.lt.s32.totalorder %s17, 1
      %s264 = scalar_select %p263, %s17, 1
      %s265 = scalar_lea.vmem %s3, %s264
      %p266 = pneg %p116
      %p267 = pneg %p113
      %p268 = pneg %p137
      %p269 = pneg %p134
      %p270 = pneg %p158
      %p271 = pneg %p155
      %p272 = pneg %p184
      %p273 = pneg %p181
      %p274 = scmp.lt.s32.totalorder %s17, 1
      %s275 = scalar_select %p274, %s17, 1
      %s276 = smul.addr %s275, 8
      %s277 = scalar_lea.vmem %s6, %s276
      %p278 = scmp.lt.s32.totalorder %s17, 1
      %s279 = scalar_select %p278, %s17, 1
      %s280 = smul.addr %s279, 16
      %s281 = smul.addr %s280, 8
      %s282 = scalar_lea.vmem %s0, %s281
      %p283 = scmp.lt.s32.totalorder %s17, 1
      %s284 = scalar_select %p283, %s17, 1
      %s285 = smul.addr %s284, 16
      %s286 = smul.addr %s285, 8
      %s287 = scalar_lea.vmem %s1, %s286
      %p288 = scmp.lt.s32.totalorder %s17, 1
      %s289 = scalar_select %p288, %s17, 1
      %s290 = scalar_lea.vmem %s2, %s289
      %p291 = scmp.lt.s32.totalorder %s17, 1
      %s292 = scalar_select %p291, %s17, 1
      %s293 = scalar_lea.vmem %s3, %s292
      %p294 = scmp.lt.s32.totalorder %s17, 1
      %s295 = scalar_select %p294, %s17, 1
      %s296 = smul.addr %s295, 8
      %s297 = scalar_lea.vmem %s6, %s296
      %v298 = vld [vmem:[%s282] sm:$0xff]
      %v299 = vld [vmem:[%s282 + $0x8] sm:$0xff]
      %v300 = vld [vmem:[%s282 + $0x10] sm:$0xff]
      %v301 = vld [vmem:[%s282 + $0x18] sm:$0xff]
      %v302 = vld [vmem:[%s282 + $0x20] sm:$0xff]
      %v303 = vld [vmem:[%s282 + $0x28] sm:$0xff]
      %v304 = vld [vmem:[%s282 + $0x30] sm:$0xff]
      %v305 = vld [vmem:[%s282 + $0x38] sm:$0xff]
      %v306 = vld [vmem:[%s282 + $0x40] sm:$0xff]
      %v307 = vld [vmem:[%s282 + $0x48] sm:$0xff]
      %v308 = vld [vmem:[%s282 + $0x50] sm:$0xff]
      %v309 = vld [vmem:[%s282 + $0x58] sm:$0xff]
      %v310 = vld [vmem:[%s282 + $0x60] sm:$0xff]
      %v311 = vld [vmem:[%s282 + $0x68] sm:$0xff]
      %v312 = vld [vmem:[%s282 + $0x70] sm:$0xff]
      %v313 = vld [vmem:[%s282 + $0x78] sm:$0xff]
      %v314 = vld [vmem:[%s287] sm:$0xff]
      %v315 = vld [vmem:[%s287 + $0x8] sm:$0xff]
      %v316 = vld [vmem:[%s287 + $0x10] sm:$0xff]
      %v317 = vld [vmem:[%s287 + $0x18] sm:$0xff]
      %v318 = vld [vmem:[%s287 + $0x20] sm:$0xff]
      %v319 = vld [vmem:[%s287 + $0x28] sm:$0xff]
      %v320 = vld [vmem:[%s287 + $0x30] sm:$0xff]
      %v321 = vld [vmem:[%s287 + $0x38] sm:$0xff]
      %v322 = vld [vmem:[%s287 + $0x40] sm:$0xff]
      %v323 = vld [vmem:[%s287 + $0x48] sm:$0xff]
      %v324 = vld [vmem:[%s287 + $0x50] sm:$0xff]
      %v325 = vld [vmem:[%s287 + $0x58] sm:$0xff]
      %v326 = vld [vmem:[%s287 + $0x60] sm:$0xff]
      %v327 = vld [vmem:[%s287 + $0x68] sm:$0xff]
      %v328 = vld [vmem:[%s287 + $0x70] sm:$0xff]
      %v329 = vld [vmem:[%s287 + $0x78] sm:$0xff]
      %v330 = vld [vmem:[%s290] sm:$0x1]
      %v331 = vld [vmem:[%s293] sm:$0x1]
      %v332 = vld [vmem:[%s4] sm:$0x3f]
      %v333 = vld [vmem:[%s5] sm:$0x3]
      %v334 = vpack.c.bf16 %v299, %v298
      %v335 = vpack.c.bf16 %v301, %v300
      %v336 = vpack.c.bf16 %v303, %v302
      %v337 = vpack.c.bf16 %v305, %v304
      %v338 = vpack.c.bf16 %v307, %v306
      %v339 = vpack.c.bf16 %v309, %v308
      %v340 = vpack.c.bf16 %v311, %v310
      %v341 = vpack.c.bf16 %v313, %v312
      %v342 = vpack.c.bf16 %v315, %v314
      %v343 = vpack.c.bf16 %v317, %v316
      %v344 = vpack.c.bf16 %v319, %v318
      %v345 = vpack.c.bf16 %v321, %v320
      %v346 = vpack.c.bf16 %v323, %v322
      %v347 = vpack.c.bf16 %v325, %v324
      %v348 = vpack.c.bf16 %v327, %v326
      %v349 = vpack.c.bf16 %v329, %v328
      %v350 = vperm.slane %v332, 4
      %v351 = vmul.f32 %v298, %v350
      %v352 = vmul.f32 %v299, %v350
      %v353 = vmul.f32 %v300, %v350
      %v354 = vmul.f32 %v301, %v350
      %v355 = vmul.f32 %v302, %v350
      %v356 = vmul.f32 %v303, %v350
      %v357 = vmul.f32 %v304, %v350
      %v358 = vmul.f32 %v305, %v350
      %v359 = vmul.f32 %v306, %v350
      %v360 = vmul.f32 %v307, %v350
      %v361 = vmul.f32 %v308, %v350
      %v362 = vmul.f32 %v309, %v350
      %v363 = vmul.f32 %v310, %v350
      %v364 = vmul.f32 %v311, %v350
      %v365 = vmul.f32 %v312, %v350
      %v366 = vmul.f32 %v313, %v350
      %v367 = vpack.c.bf16 %v352, %v351
      %v368 = vpack.c.bf16 %v354, %v353
      %v369 = vpack.c.bf16 %v356, %v355
      %v370 = vpack.c.bf16 %v358, %v357
      %v371 = vpack.c.bf16 %v360, %v359
      %v372 = vpack.c.bf16 %v362, %v361
      %v373 = vpack.c.bf16 %v364, %v363
      %v374 = vpack.c.bf16 %v366, %v365
      %v375 = vperm.slane %v332, 0
      %v376 = vmul.f32 %v298, %v375
      %v377 = vmul.f32 %v299, %v375
      %v378 = vmul.f32 %v300, %v375
      %v379 = vmul.f32 %v301, %v375
      %v380 = vmul.f32 %v302, %v375
      %v381 = vmul.f32 %v303, %v375
      %v382 = vmul.f32 %v304, %v375
      %v383 = vmul.f32 %v305, %v375
      %v384 = vmul.f32 %v306, %v375
      %v385 = vmul.f32 %v307, %v375
      %v386 = vmul.f32 %v308, %v375
      %v387 = vmul.f32 %v309, %v375
      %v388 = vmul.f32 %v310, %v375
      %v389 = vmul.f32 %v311, %v375
      %v390 = vmul.f32 %v312, %v375
      %v391 = vmul.f32 %v313, %v375
      %392 = vadd.xlane.f32.xlu0 %v376
      %v393 = vpop.xlane.xlu0 %392
      %394 = vadd.xlane.f32.xlu0 %v377
      %v395 = vpop.xlane.xlu0 %394
      %396 = vadd.xlane.f32.xlu0 %v378
      %v397 = vpop.xlane.xlu0 %396
      %398 = vadd.xlane.f32.xlu0 %v379
      %v399 = vpop.xlane.xlu0 %398
      %400 = vadd.xlane.f32.xlu0 %v380
      %v401 = vpop.xlane.xlu0 %400
      %402 = vadd.xlane.f32.xlu0 %v381
      %v403 = vpop.xlane.xlu0 %402
      %404 = vadd.xlane.f32.xlu0 %v382
      %v405 = vpop.xlane.xlu0 %404
      %406 = vadd.xlane.f32.xlu0 %v383
      %v407 = vpop.xlane.xlu0 %406
      %408 = vadd.xlane.f32.xlu0 %v384
      %v409 = vpop.xlane.xlu0 %408
      %410 = vadd.xlane.f32.xlu0 %v385
      %v411 = vpop.xlane.xlu0 %410
      %412 = vadd.xlane.f32.xlu0 %v386
      %v413 = vpop.xlane.xlu0 %412
      %414 = vadd.xlane.f32.xlu0 %v387
      %v415 = vpop.xlane.xlu0 %414
      %416 = vadd.xlane.f32.xlu0 %v388
      %v417 = vpop.xlane.xlu0 %416
      %418 = vadd.xlane.f32.xlu0 %v389
      %v419 = vpop.xlane.xlu0 %418
      %420 = vadd.xlane.f32.xlu0 %v390
      %v421 = vpop.xlane.xlu0 %420
      %422 = vadd.xlane.f32.xlu0 %v391
      %v423 = vpop.xlane.xlu0 %422
      %v424 = vpack.c.bf16 %v332, %v332
      %v426 = vrot.slane %v424, 1
      %428 = vmatpush.bf16.xpose.msra.mxu0 %v349
      %429 = vmatpush.bf16.xpose.msra.mxu0 %v348
      %430 = vmatpush.bf16.xpose.msra.mxu0 %v347
      %431 = vmatpush.bf16.xpose.msra.mxu0 %v346
      %432 = vmatpush.bf16.xpose.msra.mxu0 %v345
      %433 = vmatpush.bf16.xpose.msra.mxu0 %v344
      %434 = vmatpush.bf16.xpose.msra.mxu0 %v343
      %435 = vmatpush.bf16.xpose.msra.mxu0 %v342
      %436 = vmatmul.bf16.gmra.mxu0 %v426
      %v437 = vpop.f32.mrf.mxu0
      %v438 = vadd.f32 0.0, %v437
      %v439 = vpop.f32.mrf.mxu0
      %440 = vdwg.mxu0
      %441 = vmatpush.bf16.xpose.msra.mxu0 %v349
      %442 = vmatpush.bf16.xpose.msra.mxu0 %v348
      %443 = vmatpush.bf16.xpose.msra.mxu0 %v347
      %444 = vmatpush.bf16.xpose.msra.mxu0 %v346
      %445 = vmatpush.bf16.xpose.msra.mxu0 %v345
      %446 = vmatpush.bf16.xpose.msra.mxu0 %v344
      %447 = vmatpush.bf16.xpose.msra.mxu0 %v343
      %448 = vmatpush.bf16.xpose.msra.mxu0 %v342
      %449 = vmatmul.bf16.gmra.mxu0 %v367
      %v450 = vpop.f32.mrf.mxu0
      %v451 = vadd.f32 %v393, %v450
      %v452 = vpop.f32.mrf.mxu0
      %v453 = vadd.f32 %v395, %v452
      %454 = vmatmul.bf16.gmra.mxu0 %v368
      %v455 = vpop.f32.mrf.mxu0
      %v456 = vadd.f32 %v397, %v455
      %v457 = vpop.f32.mrf.mxu0
      %v458 = vadd.f32 %v399, %v457
      %459 = vmatmul.bf16.gmra.mxu0 %v369
      %v460 = vpop.f32.mrf.mxu0
      %v461 = vadd.f32 %v401, %v460
      %v462 = vpop.f32.mrf.mxu0
      %v463 = vadd.f32 %v403, %v462
      %464 = vmatmul.bf16.gmra.mxu0 %v370
      %v465 = vpop.f32.mrf.mxu0
      %v466 = vadd.f32 %v405, %v465
      %v467 = vpop.f32.mrf.mxu0
      %v468 = vadd.f32 %v407, %v467
      %469 = vmatmul.bf16.gmra.mxu0 %v371
      %v470 = vpop.f32.mrf.mxu0
      %v471 = vadd.f32 %v409, %v470
      %v472 = vpop.f32.mrf.mxu0
      %v473 = vadd.f32 %v411, %v472
      %474 = vmatmul.bf16.gmra.mxu0 %v372
      %v475 = vpop.f32.mrf.mxu0
      %v476 = vadd.f32 %v413, %v475
      %v477 = vpop.f32.mrf.mxu0
      %v478 = vadd.f32 %v415, %v477
      %479 = vmatmul.bf16.gmra.mxu0 %v373
      %v480 = vpop.f32.mrf.mxu0
      %v481 = vadd.f32 %v417, %v480
      %v482 = vpop.f32.mrf.mxu0
      %v483 = vadd.f32 %v419, %v482
      %484 = vmatmul.bf16.gmra.mxu0 %v374
      %v485 = vpop.f32.mrf.mxu0
      %v486 = vadd.f32 %v421, %v485
      %v487 = vpop.f32.mrf.mxu0
      %v488 = vadd.f32 %v423, %v487
      %489 = vdwg.mxu0
      %v490 = vperm.slane %v438, 0
      %v491 = vadd.f32 %v451, %v490
      %v492 = vadd.f32 %v453, %v490
      %v493 = vadd.f32 %v456, %v490
      %v494 = vadd.f32 %v458, %v490
      %v495 = vadd.f32 %v461, %v490
      %v496 = vadd.f32 %v463, %v490
      %v497 = vadd.f32 %v466, %v490
      %v498 = vadd.f32 %v468, %v490
      %v499 = vadd.f32 %v471, %v490
      %v500 = vadd.f32 %v473, %v490
      %v501 = vadd.f32 %v476, %v490
      %v502 = vadd.f32 %v478, %v490
      %v503 = vadd.f32 %v481, %v490
      %v504 = vadd.f32 %v483, %v490
      %v505 = vadd.f32 %v486, %v490
      %v506 = vadd.f32 %v488, %v490
      %s508 = vtos %v333
      %v509 = vstv %s508
      %v511 = vadd.f32 %v491, %v509
      %v512 = vadd.f32 %v492, %v509
      %v513 = vadd.f32 %v493, %v509
      %v514 = vadd.f32 %v494, %v509
      %v515 = vadd.f32 %v495, %v509
      %v516 = vadd.f32 %v496, %v509
      %v517 = vadd.f32 %v497, %v509
      %v518 = vadd.f32 %v498, %v509
      %v519 = vadd.f32 %v499, %v509
      %v520 = vadd.f32 %v500, %v509
      %v521 = vadd.f32 %v501, %v509
      %v522 = vadd.f32 %v502, %v509
      %v523 = vadd.f32 %v503, %v509
      %v524 = vadd.f32 %v504, %v509
      %v525 = vadd.f32 %v505, %v509
      %v526 = vadd.f32 %v506, %v509
      %v528 = vperm.slane %v331, 0
      %v530 = vmul.f32 %v511, %v528
      %v531 = vmul.f32 %v512, %v528
      %v532 = vmul.f32 %v513, %v528
      %v533 = vmul.f32 %v514, %v528
      %v534 = vmul.f32 %v515, %v528
      %v535 = vmul.f32 %v516, %v528
      %v536 = vmul.f32 %v517, %v528
      %v537 = vmul.f32 %v518, %v528
      %v538 = vmul.f32 %v519, %v528
      %v539 = vmul.f32 %v520, %v528
      %v540 = vmul.f32 %v521, %v528
      %v541 = vmul.f32 %v522, %v528
      %v542 = vmul.f32 %v523, %v528
      %v543 = vmul.f32 %v524, %v528
      %v544 = vmul.f32 %v525, %v528
      %v545 = vmul.f32 %v526, %v528
      %546 = vmax.xlane.f32.xlu0 %v530
      %v547 = vpop.xlane.xlu0 %546
      %548 = vmax.xlane.f32.xlu0 %v531
      %v549 = vpop.xlane.xlu0 %548
      %550 = vmax.xlane.f32.xlu0 %v532
      %v551 = vpop.xlane.xlu0 %550
      %552 = vmax.xlane.f32.xlu0 %v533
      %v553 = vpop.xlane.xlu0 %552
      %554 = vmax.xlane.f32.xlu0 %v534
      %v555 = vpop.xlane.xlu0 %554
      %556 = vmax.xlane.f32.xlu0 %v535
      %v557 = vpop.xlane.xlu0 %556
      %558 = vmax.xlane.f32.xlu0 %v536
      %v559 = vpop.xlane.xlu0 %558
      %560 = vmax.xlane.f32.xlu0 %v537
      %v561 = vpop.xlane.xlu0 %560
      %562 = vmax.xlane.f32.xlu0 %v538
      %v563 = vpop.xlane.xlu0 %562
      %564 = vmax.xlane.f32.xlu0 %v539
      %v565 = vpop.xlane.xlu0 %564
      %566 = vmax.xlane.f32.xlu0 %v540
      %v567 = vpop.xlane.xlu0 %566
      %568 = vmax.xlane.f32.xlu0 %v541
      %v569 = vpop.xlane.xlu0 %568
      %570 = vmax.xlane.f32.xlu0 %v542
      %v571 = vpop.xlane.xlu0 %570
      %572 = vmax.xlane.f32.xlu0 %v543
      %v573 = vpop.xlane.xlu0 %572
      %574 = vmax.xlane.f32.xlu0 %v544
      %v575 = vpop.xlane.xlu0 %574
      %576 = vmax.xlane.f32.xlu0 %v545
      %v577 = vpop.xlane.xlu0 %576
      %v578 = vsub.f32 %v530, %v547
      %v579 = vsub.f32 %v531, %v549
      %v580 = vsub.f32 %v532, %v551
      %v581 = vsub.f32 %v533, %v553
      %v582 = vsub.f32 %v534, %v555
      %v583 = vsub.f32 %v535, %v557
      %v584 = vsub.f32 %v536, %v559
      %v585 = vsub.f32 %v537, %v561
      %v586 = vsub.f32 %v538, %v563
      %v587 = vsub.f32 %v539, %v565
      %v588 = vsub.f32 %v540, %v567
      %v589 = vsub.f32 %v541, %v569
      %v590 = vsub.f32 %v542, %v571
      %v591 = vsub.f32 %v543, %v573
      %v592 = vsub.f32 %v544, %v575
      %v593 = vsub.f32 %v545, %v577
      %v594 = vmul.f32 %v578, 1.442695
      %v595 = vpow.pop %v594
      %v596 = vmul.f32 %v579, 1.442695
      %v597 = vpow.pop %v596
      %v598 = vmul.f32 %v580, 1.442695
      %v599 = vpow.pop %v598
      %v600 = vmul.f32 %v581, 1.442695
      %v601 = vpow.pop %v600
      %v602 = vmul.f32 %v582, 1.442695
      %v603 = vpow.pop %v602
      %v604 = vmul.f32 %v583, 1.442695
      %v605 = vpow.pop %v604
      %v606 = vmul.f32 %v584, 1.442695
      %v607 = vpow.pop %v606
      %v608 = vmul.f32 %v585, 1.442695
      %v609 = vpow.pop %v608
      %v610 = vmul.f32 %v586, 1.442695
      %v611 = vpow.pop %v610
      %v612 = vmul.f32 %v587, 1.442695
      %v613 = vpow.pop %v612
      %v614 = vmul.f32 %v588, 1.442695
      %v615 = vpow.pop %v614
      %v616 = vmul.f32 %v589, 1.442695
      %v617 = vpow.pop %v616
      %v618 = vmul.f32 %v590, 1.442695
      %v619 = vpow.pop %v618
      %v620 = vmul.f32 %v591, 1.442695
      %v621 = vpow.pop %v620
      %v622 = vmul.f32 %v592, 1.442695
      %v623 = vpow.pop %v622
      %v624 = vmul.f32 %v593, 1.442695
      %v625 = vpow.pop %v624
      %v626 = vmul.f32 %v595, %v528
      %v627 = vmul.f32 %v597, %v528
      %v628 = vmul.f32 %v599, %v528
      %v629 = vmul.f32 %v601, %v528
      %v630 = vmul.f32 %v603, %v528
      %v631 = vmul.f32 %v605, %v528
      %v632 = vmul.f32 %v607, %v528
      %v633 = vmul.f32 %v609, %v528
      %v634 = vmul.f32 %v611, %v528
      %v635 = vmul.f32 %v613, %v528
      %v636 = vmul.f32 %v615, %v528
      %v637 = vmul.f32 %v617, %v528
      %v638 = vmul.f32 %v619, %v528
      %v639 = vmul.f32 %v621, %v528
      %v640 = vmul.f32 %v623, %v528
      %v641 = vmul.f32 %v625, %v528
      %642 = vadd.xlane.f32.xlu0 %v626
      %v643 = vpop.xlane.xlu0 %642
      %644 = vadd.xlane.f32.xlu0 %v627
      %v645 = vpop.xlane.xlu0 %644
      %646 = vadd.xlane.f32.xlu0 %v628
      %v647 = vpop.xlane.xlu0 %646
      %648 = vadd.xlane.f32.xlu0 %v629
      %v649 = vpop.xlane.xlu0 %648
      %650 = vadd.xlane.f32.xlu0 %v630
      %v651 = vpop.xlane.xlu0 %650
      %652 = vadd.xlane.f32.xlu0 %v631
      %v653 = vpop.xlane.xlu0 %652
      %654 = vadd.xlane.f32.xlu0 %v632
      %v655 = vpop.xlane.xlu0 %654
      %656 = vadd.xlane.f32.xlu0 %v633
      %v657 = vpop.xlane.xlu0 %656
      %658 = vadd.xlane.f32.xlu0 %v634
      %v659 = vpop.xlane.xlu0 %658
      %660 = vadd.xlane.f32.xlu0 %v635
      %v661 = vpop.xlane.xlu0 %660
      %662 = vadd.xlane.f32.xlu0 %v636
      %v663 = vpop.xlane.xlu0 %662
      %664 = vadd.xlane.f32.xlu0 %v637
      %v665 = vpop.xlane.xlu0 %664
      %666 = vadd.xlane.f32.xlu0 %v638
      %v667 = vpop.xlane.xlu0 %666
      %668 = vadd.xlane.f32.xlu0 %v639
      %v669 = vpop.xlane.xlu0 %668
      %670 = vadd.xlane.f32.xlu0 %v640
      %v671 = vpop.xlane.xlu0 %670
      %672 = vadd.xlane.f32.xlu0 %v641
      %v673 = vpop.xlane.xlu0 %672
      %v674 = vadd.f32 %v643, 1e-13
      %v675 = vadd.f32 %v645, 1e-13
      %v676 = vadd.f32 %v647, 1e-13
      %v677 = vadd.f32 %v649, 1e-13
      %v678 = vadd.f32 %v651, 1e-13
      %v679 = vadd.f32 %v653, 1e-13
      %v680 = vadd.f32 %v655, 1e-13
      %v681 = vadd.f32 %v657, 1e-13
      %v682 = vadd.f32 %v659, 1e-13
      %v683 = vadd.f32 %v661, 1e-13
      %v684 = vadd.f32 %v663, 1e-13
      %v685 = vadd.f32 %v665, 1e-13
      %v686 = vadd.f32 %v667, 1e-13
      %v687 = vadd.f32 %v669, 1e-13
      %v688 = vadd.f32 %v671, 1e-13
      %v689 = vadd.f32 %v673, 1e-13
      %v690 = vrcp.pop %v674
      %v691 = vrcp.pop %v675
      %v692 = vrcp.pop %v676
      %v693 = vrcp.pop %v677
      %v694 = vrcp.pop %v678
      %v695 = vrcp.pop %v679
      %v696 = vrcp.pop %v680
      %v697 = vrcp.pop %v681
      %v698 = vrcp.pop %v682
      %v699 = vrcp.pop %v683
      %v700 = vrcp.pop %v684
      %v701 = vrcp.pop %v685
      %v702 = vrcp.pop %v686
      %v703 = vrcp.pop %v687
      %v704 = vrcp.pop %v688
      %v705 = vrcp.pop %v689
      %v706 = vmul.f32 %v626, %v690
      %v707 = vmul.f32 %v627, %v691
      %v708 = vmul.f32 %v628, %v692
      %v709 = vmul.f32 %v629, %v693
      %v710 = vmul.f32 %v630, %v694
      %v711 = vmul.f32 %v631, %v695
      %v712 = vmul.f32 %v632, %v696
      %v713 = vmul.f32 %v633, %v697
      %v714 = vmul.f32 %v634, %v698
      %v715 = vmul.f32 %v635, %v699
      %v716 = vmul.f32 %v636, %v700
      %v717 = vmul.f32 %v637, %v701
      %v718 = vmul.f32 %v638, %v702
      %v719 = vmul.f32 %v639, %v703
      %v720 = vmul.f32 %v640, %v704
      %v721 = vmul.f32 %v641, %v705
      %v722 = vpack.c.bf16 %v707, %v706
      %v723 = vpack.c.bf16 %v709, %v708
      %v724 = vpack.c.bf16 %v711, %v710
      %v725 = vpack.c.bf16 %v713, %v712
      %v726 = vpack.c.bf16 %v715, %v714
      %v727 = vpack.c.bf16 %v717, %v716
      %v728 = vpack.c.bf16 %v719, %v718
      %v729 = vpack.c.bf16 %v721, %v720
      %730 = vmatpush.bf16.msra.mxu0 %v349
      %731 = vmatpush.bf16.msra.mxu0 %v348
      %732 = vmatpush.bf16.msra.mxu0 %v347
      %733 = vmatpush.bf16.msra.mxu0 %v346
      %734 = vmatpush.bf16.msra.mxu0 %v345
      %735 = vmatpush.bf16.msra.mxu0 %v344
      %736 = vmatpush.bf16.msra.mxu0 %v343
      %737 = vmatpush.bf16.msra.mxu0 %v342
      %738 = vmatmul.bf16.gmra.mxu0 %v722
      %v739 = vpop.f32.mrf.mxu0
      %v740 = vadd.f32 0.0, %v739
      %v741 = vpop.f32.mrf.mxu0
      %v742 = vadd.f32 0.0, %v741
      %743 = vmatmul.bf16.gmra.mxu0 %v723
      %v744 = vpop.f32.mrf.mxu0
      %v745 = vadd.f32 0.0, %v744
      %v746 = vpop.f32.mrf.mxu0
      %v747 = vadd.f32 0.0, %v746
      %748 = vmatmul.bf16.gmra.mxu0 %v724
      %v749 = vpop.f32.mrf.mxu0
      %v750 = vadd.f32 0.0, %v749
      %v751 = vpop.f32.mrf.mxu0
      %v752 = vadd.f32 0.0, %v751
      %753 = vmatmul.bf16.gmra.mxu0 %v725
      %v754 = vpop.f32.mrf.mxu0
      %v755 = vadd.f32 0.0, %v754
      %v756 = vpop.f32.mrf.mxu0
      %v757 = vadd.f32 0.0, %v756
      %758 = vmatmul.bf16.gmra.mxu0 %v726
      %v759 = vpop.f32.mrf.mxu0
      %v760 = vadd.f32 0.0, %v759
      %v761 = vpop.f32.mrf.mxu0
      %v762 = vadd.f32 0.0, %v761
      %763 = vmatmul.bf16.gmra.mxu0 %v727
      %v764 = vpop.f32.mrf.mxu0
      %v765 = vadd.f32 0.0, %v764
      %v766 = vpop.f32.mrf.mxu0
      %v767 = vadd.f32 0.0, %v766
      %768 = vmatmul.bf16.gmra.mxu0 %v728
      %v769 = vpop.f32.mrf.mxu0
      %v770 = vadd.f32 0.0, %v769
      %v771 = vpop.f32.mrf.mxu0
      %v772 = vadd.f32 0.0, %v771
      %773 = vmatmul.bf16.gmra.mxu0 %v729
      %v774 = vpop.f32.mrf.mxu0
      %v775 = vadd.f32 0.0, %v774
      %v776 = vpop.f32.mrf.mxu0
      %v777 = vadd.f32 0.0, %v776
      %778 = vdwg.mxu0
      %v779 = vpack.c.bf16 %v742, %v740
      %v780 = vpack.c.bf16 %v747, %v745
      %v781 = vpack.c.bf16 %v752, %v750
      %v782 = vpack.c.bf16 %v757, %v755
      %v783 = vpack.c.bf16 %v762, %v760
      %v784 = vpack.c.bf16 %v767, %v765
      %v785 = vpack.c.bf16 %v772, %v770
      %v786 = vpack.c.bf16 %v777, %v775
      %787 = vmatpush.bf16.xpose.msra.mxu0 %v786
      %788 = vmatpush.bf16.xpose.msra.mxu0 %v785
      %789 = vmatpush.bf16.xpose.msra.mxu0 %v784
      %790 = vmatpush.bf16.xpose.msra.mxu0 %v783
      %791 = vmatpush.bf16.xpose.msra.mxu0 %v782
      %792 = vmatpush.bf16.xpose.msra.mxu0 %v781
      %793 = vmatpush.bf16.xpose.msra.mxu0 %v780
      %794 = vmatpush.bf16.xpose.msra.mxu0 %v779
      %795 = vmatmul.bf16.gmra.mxu0 %v426
      %v796 = vpop.f32.mrf.mxu0
      %v797 = vadd.f32 0.0, %v796
      %v798 = vpop.f32.mrf.mxu0
      %799 = vdwg.mxu0
      %800 = vmatpush.bf16.xpose.msra.mxu0 %v341
      %801 = vmatpush.bf16.xpose.msra.mxu0 %v340
      %802 = vmatpush.bf16.xpose.msra.mxu0 %v339
      %803 = vmatpush.bf16.xpose.msra.mxu0 %v338
      %804 = vmatpush.bf16.xpose.msra.mxu0 %v337
      %805 = vmatpush.bf16.xpose.msra.mxu0 %v336
      %806 = vmatpush.bf16.xpose.msra.mxu0 %v335
      %807 = vmatpush.bf16.xpose.msra.mxu0 %v334
      %808 = vmatmul.bf16.gmra.mxu0 %v424
      %v809 = vpop.f32.mrf.mxu0
      %v810 = vadd.f32 %v797, %v809
      %v811 = vpop.f32.mrf.mxu0
      %812 = vdwg.mxu0
      %v813 = vmul.f32 %v298, %v740
      %v814 = vmul.f32 %v299, %v742
      %v815 = vmul.f32 %v300, %v745
      %v816 = vmul.f32 %v301, %v747
      %v817 = vmul.f32 %v302, %v750
      %v818 = vmul.f32 %v303, %v752
      %v819 = vmul.f32 %v304, %v755
      %v820 = vmul.f32 %v305, %v757
      %v821 = vmul.f32 %v306, %v760
      %v822 = vmul.f32 %v307, %v762
      %v823 = vmul.f32 %v308, %v765
      %v824 = vmul.f32 %v309, %v767
      %v825 = vmul.f32 %v310, %v770
      %v826 = vmul.f32 %v311, %v772
      %v827 = vmul.f32 %v312, %v775
      %v828 = vmul.f32 %v313, %v777
      %v829 = vpack.c.bf16 %v814, %v813
      %v830 = vpack.c.bf16 %v816, %v815
      %v831 = vpack.c.bf16 %v818, %v817
      %v832 = vpack.c.bf16 %v820, %v819
      %v833 = vpack.c.bf16 %v822, %v821
      %v834 = vpack.c.bf16 %v824, %v823
      %v835 = vpack.c.bf16 %v826, %v825
      %v836 = vpack.c.bf16 %v828, %v827
      %v837 = vrot.slane %v424, 2
      %839 = vmatpush.bf16.xpose.msra.mxu0 %v836
      %840 = vmatpush.bf16.xpose.msra.mxu0 %v835
      %841 = vmatpush.bf16.xpose.msra.mxu0 %v834
      %842 = vmatpush.bf16.xpose.msra.mxu0 %v833
      %843 = vmatpush.bf16.xpose.msra.mxu0 %v832
      %844 = vmatpush.bf16.xpose.msra.mxu0 %v831
      %845 = vmatpush.bf16.xpose.msra.mxu0 %v830
      %846 = vmatpush.bf16.xpose.msra.mxu0 %v829
      %847 = vmatmul.bf16.gmra.mxu0 %v837
      %v848 = vpop.f32.mrf.mxu0
      %v849 = vadd.f32 0.0, %v848
      %v850 = vpop.f32.mrf.mxu0
      %851 = vdwg.mxu0
      %v852 = vadd.f32 %v810, %v849
      %853 = vset.pattern.permute.xlu0 0
      %854 = vperm.xlu0 %853, %v333
      %v855 = vpop.permute.xlu0 %854
      %v857 = vadd.f32 %v852, %v855
      %v859 = vperm.slane %v330, 0
      %v861 = vmul.f32 %v857, %v859
      %v862 = vsub.f32 1.0, %v330
      %v863 = vmul.f32 %v862, -10000000.0
      %v865 = vperm.slane %v863, 0
      %v867 = vadd.f32 %v861, %v865
      %v868 = vmax.f32 %v330, 1e-37
      %v869 = vlog2.pop %v868
      %v870 = vmul.f32 %v869, 0.6931472
      %v872 = vperm.slane %v870, 0
      %v874 = vadd.f32 %v867, %v872
      %vm875 = vcmask 1041408
      %v876 = vsel %vm875, %v874, -inf
      %877 = vmax.xlane.f32.xlu0 %v876
      %v878 = vpop.xlane.xlu0 %877
      %v879 = vsub.f32 %v874, %v878
      %v880 = vmul.f32 %v879, 1.442695
      %v881 = vpow.pop %v880
      %v882 = vsel %vm875, %v881, 0.0
      %883 = vadd.xlane.f32.xlu0 %v882
      %v884 = vpop.xlane.xlu0 %883
      %v885 = vlog2.pop %v884
      %v886 = vmul.f32 %v885, 0.6931472
      %v887 = vsub.f32 %v879, %v886
      %v889 = vrot.slane %v887, 6
      %v891 = vsel %vm875, %v867, %v889
      %vm892 = vcmask 1043456
      %v893 = vsel %vm892, %v891, 0.0
      %894 = vst [vmem:[%s297] sm:$0xff] %v893
      %p895 = scmp.lt.s32.totalorder %s17, 1
      %s896 = scalar_select %p895, %s17, 1
      %s897 = smul.addr %s896, 8
      %s898 = scalar_lea.vmem %s6, %s897
      // Predicated region
      $region45: #{attention_rnn_forward.1} parent=43 // pred_check
        %p899 = pneg %p181
      $region46: #{attention_rnn_forward.1} parent=43 // pred_check_branch
        %901 = sbr.rel (%p899) target = $region48
      $region47: #{attention_rnn_forward.1} parent=43 // pred_region
        _
      $region48: #{attention_rnn_forward.1} parent=43 // pred_fallthru
        _
    $region44: #{attention_rnn_forward.1} parent=5 // pred_fallthru
      _
    %p902 = scmp.le.s32.totalorder 2, %s12
    // Predicated region
    $region49: #{attention_rnn_forward.1} parent=5 // pred_check
      %p903 = pneg %p902
    $region50: #{attention_rnn_forward.1} parent=5 // pred_check_branch
      %905 = sbr.rel (%p903) target = $region52
    $region51: #{attention_rnn_forward.1} parent=5 // pred_region
      %s906 = ssub.s32 %s12, 2
      // Predicated region
      $region53: #{attention_rnn_forward.1} parent=51 // pred_check
        %p907 = pneg %p187
      $region54: #{attention_rnn_forward.1} parent=51 // pred_check_branch
        %909 = sbr.rel (%p907) target = $region56
      $region55: #{attention_rnn_forward.1} parent=51 // pred_region
        %p910 = scmp.lt.s32.totalorder %s18, 1
        %s911 = scalar_select %p910, %s18, 1
        %s912 = smul.addr %s911, 8
        %s913 = scalar_lea.vmem %s6, %s912
      $region56: #{attention_rnn_forward.1} parent=51 // pred_fallthru
        _
    $region52: #{attention_rnn_forward.1} parent=5 // pred_fallthru
      _
  $region6: #{attention_rnn_forward.1} parent=0 // loop_footer
    %s16 = sadd.s32 1, %s12
  $region7: #{attention_rnn_forward.1} parent=0 // loop_footer_branch
    %11 = sbr.rel target = $region3
  $region8: #{attention_rnn_forward.1} parent=0 // loop_exit
    _

</llo_original>
